<compile_context>
chip_gen: v7x
topology: tpu7x:2x2x1
jax: 0.10.0
libtpu: 0.0.40
codegen_flags: <defaults>
</compile_context>

<pallas_src>
from types import SimpleNamespace

import jax
import jax.numpy as jnp
from jax.experimental import pallas as pl
from jax.experimental.pallas import tpu as pltpu

_LANE = 128


def _cdiv(a, b):
    return -(-a // b)


def _round_up(x, m):
    return _cdiv(x, m) * m


# ----------------------------------------------------------------------------
# One fused kernel for a list of mean-loss "segments".
#   ("mse", pred_1d, label_1d)   -> mean (p - y)^2
#   ("bce", pred_1d, label_1d)   -> mean BCE-with-logits
#   ("ce",  logits_2d, labels_1d)-> mean cross-entropy (integer labels)
# Returns a list of float32 scalars, one per segment, from ONE pallas_call.
# ----------------------------------------------------------------------------

def _fused_mean_losses(segments, *, max_block_rows=2048, max_block_cols=8192,
                       num_cores=None):
    nseg = len(segments)
    assert nseg >= 1
    arrays = []
    metas = []

    for kind, a, b in segments:
        if kind in ("mse", "bce"):
            p = jnp.ravel(a)
            y = jnp.ravel(b)
            n = int(p.shape[0])
            rows = max(1, _cdiv(n, _LANE))
            rows8 = _round_up(rows, 8)
            tgt = max(1, _cdiv(rows8, max_block_rows))
            block_rows = _round_up(_cdiv(rows8, tgt), 8)     # balanced blocks
            rows_pad = _round_up(rows8, block_rows)
            nblocks = rows_pad // block_rows
            pad = rows_pad * _LANE - n
            # Loss-neutral padding: MSE pad 0/0 -> 0; BCE pad (-100, 0) -> 0.
            pad_p = 0.0 if kind == "mse" else -100.0
            p2 = jnp.pad(p, (0, pad), constant_values=pad_p).reshape(rows_pad, _LANE)
            y2 = jnp.pad(y, (0, pad)).reshape(rows_pad, _LANE)
            arrays += [p2, y2]
            metas.append(dict(kind=kind, layout="rows", nblocks=nblocks,
                              inv_cnt=1.0 / max(n, 1),
                              a_block=(block_rows, _LANE),
                              b_block=(block_rows, _LANE)))
        elif kind == "ce":
            n, c = int(a.shape[0]), int(a.shape[1])
            n_lanes = _round_up(max(n, 1), _LANE)
            tgt = max(1, _cdiv(n_lanes, max_block_cols))
            block_n = _round_up(_cdiv(n_lanes, tgt), _LANE)  # balanced blocks
            n_pad = _round_up(n_lanes, block_n)
            nblocks = n_pad // block_n
            # TODO(synk): fold this transpose into the producer's layout for large N.
            lg_t = jnp.pad(jnp.transpose(a), ((0, 0), (0, n_pad - n)))     # (C, Npad)
            lab = jnp.pad(b.astype(jnp.int32).reshape(1, n),
                          ((0, 0), (0, n_pad - n)))                        # (1, Npad)
            arrays += [lg_t, lab]
            metas.append(dict(kind="ce", layout="cols", nblocks=nblocks,
                              block_n=block_n, n_valid=n,
                              needs_mask=(n_pad != n),
                              inv_cnt=1.0 / max(n, 1),
                              a_block=(c, block_n),
                              b_block=(1, block_n)))
        else:
            raise ValueError(f"unknown segment kind: {kind}")

    total_blocks = max(m["nblocks"] for m in metas)
    if num_cores is None:
        # Dual-TC split (v7x) only when there is enough work to amortize it.
        num_cores = 2 if total_blocks >= 8 else 1
    bpc = _cdiv(total_blocks, num_cores)       # blocks per core
    grid_total = num_cores * bpc

    def make_imap(nblk, layout):
        if layout == "rows":
            def imap(ci, ii):
                g = ci * bpc + ii
                return (jnp.minimum(g, nblk - 1), 0)
        else:
            def imap(ci, ii):
                g = ci * bpc + ii
                return (0, jnp.minimum(g, nblk - 1))
        return imap

    in_specs = []
    for m in metas:
        in_specs.append(pl.BlockSpec(m["a_block"], make_imap(m["nblocks"], m["layout"])))
        in_specs.append(pl.BlockSpec(m["b_block"], make_imap(m["nblocks"], m["layout"])))

    out_specs = tuple(pl.BlockSpec((8, _LANE), lambda ci, ii: (ci, 0))
                      for _ in range(nseg))
    out_shape = tuple(jax.ShapeDtypeStruct((num_cores * 8, _LANE), jnp.float32)
                      for _ in range(nseg))

    def kernel(*refs):
        in_refs = refs[:2 * nseg]
        out_refs = refs[2 * nseg:]
        ci = pl.program_id(0)
        ii = pl.program_id(1)
        g = ci * bpc + ii

        @pl.when(ii == 0)
        def _init():
            for o in out_refs:
                o[...] = jnp.zeros_like(o)

        for s in range(nseg):
            m = metas[s]
            a_ref = in_refs[2 * s]
            b_ref = in_refs[2 * s + 1]
            o_ref = out_refs[s]

            def compute(a_ref=a_ref, b_ref=b_ref, o_ref=o_ref, m=m):
                if m["kind"] in ("mse", "bce"):
                    xb = a_ref[...].astype(jnp.float32)
                    yb = b_ref[...].astype(jnp.float32)
                    if m["kind"] == "mse":
                        d = xb - yb
                        loss = d * d
                    else:
                        # Stable BCE-with-logits: max(x,0) - x*y + log1p(exp(-|x|))
                        loss = (jnp.maximum(xb, 0.0) - xb * yb
                                + jnp.log1p(jnp.exp(-jnp.abs(xb))))
                    # Sublane reduce only; cross-lane reduce happens once in wrapper.
                    o_ref[0:1, :] += jnp.sum(loss, axis=0, keepdims=True)
                else:  # "ce"
                    lg = a_ref[...].astype(jnp.float32)     # (C, TN)
                    lbl = b_ref[...]                        # (1, TN) int32
                    cdim, tn = lg.shape
                    mx = jnp.max(lg, axis=0, keepdims=True)
                    lse = mx + jnp.log(jnp.sum(jnp.exp(lg - mx),
                                               axis=0, keepdims=True))
                    cls = jax.lax.broadcasted_iota(jnp.int32, (cdim, tn), 0)
                    picked = jnp.sum(jnp.where(cls == lbl, lg, 0.0),
                                     axis=0, keepdims=True)
                    per = lse - picked
                    if m["needs_mask"]:
                        col = (jax.lax.broadcasted_iota(jnp.int32, (1, tn), 1)
                               + g * m["block_n"])
                        per = jnp.where(col < m["n_valid"], per, 0.0)
                    o_ref[0:1, 0:1] += jnp.sum(per, keepdims=True)

            if m["nblocks"] == grid_total:
                compute()                       # no gate needed (static)
            else:
                pl.when(g < m["nblocks"])(compute)

        @pl.when(ii == bpc - 1)
        def _finalize():
            for s in range(nseg):
                out_refs[s][...] = out_refs[s][...] * metas[s]["inv_cnt"]

    outs = pl.pallas_call(
        kernel,
        out_shape=out_shape,
        grid=(num_cores, bpc),
        in_specs=in_specs,
        out_specs=out_specs,
        compiler_params=pltpu.CompilerParams(
            dimension_semantics=("parallel", "arbitrary")),
    )(*arrays)
    if not isinstance(outs, (list, tuple)):
        outs = (outs,)
    # Each output holds per-core partial means (already scaled by 1/N);
    # a single small reduce combines cores / lanes.
    return [jnp.sum(o) for o in outs]


# ----------------------------------------------------------------------------
# FilteringLoss module (forward semantics mirror the PyTorch module;
# F.* losses use reduction='mean').
# ----------------------------------------------------------------------------

class FilteringLoss:
    def __init__(self, args):
        self.args = args

    def __call__(self, outputs, batch, apply_mean: bool = True):
        loss_dict = {}
        predictions = outputs["filtering_pred"]
        use_atom = bool(self.args.atom_lig_confidence)

        if self.args.rmsd_prediction:
            segments = [("mse", predictions, batch.rmsd)]
        elif isinstance(self.args.rmsd_classification_cutoff, list):
            segments = [("ce", predictions, batch.y_binned)]
        else:
            segments = [("bce", predictions, batch.y)]
        if use_atom:
            segments.append(("bce", outputs["filtering_atom_pred"], batch.y_aa))

        # ONE pallas_call for every branch (main loss + optional atom BCE).
        losses = _fused_mean_losses(segments)
        filtering_loss = losses[0]
        atom_filtering_loss = losses[1] if use_atom else None

        # The kernels already emit a mean-reduced scalar (reduction='mean'),
        # so `.mean()` of the scalar is the identity for both apply_mean values;
        # we skip the extra dispatch.  (PyTorch: mean of a 0-d tensor is itself.)
        del apply_mean

        loss = self.args.filtering_weight * filtering_loss
        if use_atom:
            loss = loss + self.args.filtering_weight_atom * atom_filtering_loss

        # .detach().clone() -> stop_gradient (JAX arrays are immutable).
        loss_dict["filtering_loss"] = jax.lax.stop_gradient(filtering_loss)
        if use_atom:
            loss_dict["atom_filtering_loss"] = jax.lax.stop_gradient(atom_filtering_loss)
        loss_dict["loss"] = jax.lax.stop_gradient(loss)
        return loss, loss_dict


# ----------------------------------------------------------------------------
# Pure-JAX references for the self-test.
# ----------------------------------------------------------------------------

def _ref_mse(x, y):
    x = x.astype(jnp.float32)
    y = y.astype(jnp.float32)
    return jnp.mean((x - y) ** 2)


def _ref_bce(x, y):
    x = x.astype(jnp.float32)
    y = y.astype(jnp.float32)
    return jnp.mean(jnp.maximum(x, 0.0) - x * y + jnp.log1p(jnp.exp(-jnp.abs(x))))


def _ref_ce(logits, labels):
    logits = logits.astype(jnp.float32)
    lse = jax.nn.logsumexp(logits, axis=-1)
    picked = jnp.take_along_axis(logits, labels[:, None], axis=-1)[:, 0]
    return jnp.mean(lse - picked)


# ----------------------------------------------------------------------------
# Demo / smoke test over all branches.
# ----------------------------------------------------------------------------

if __name__ == "__main__":
    keys = jax.random.split(jax.random.PRNGKey(0), 12)
    f32 = jnp.float32

    N = 10      # number of complexes (not 128-aligned -> exercises padding)
    C = 4       # number of rmsd classification bins
    NA = 300    # number of ligand atoms

    pred_scalar = jax.random.normal(keys[0], (N,), dtype=f32)
    pred_logits = jax.random.normal(keys[1], (N, C), dtype=f32)
    atom_pred = jax.random.normal(keys[2], (NA,), dtype=f32)

    batch = SimpleNamespace(
        rmsd=jax.random.uniform(keys[3], (N,), dtype=f32) * 5.0,
        y=(jax.random.uniform(keys[4], (N,), dtype=f32) > 0.5).astype(f32),
        y_binned=jax.random.randint(keys[5], (N,), 0, C, dtype=jnp.int32),
        y_aa=(jax.random.uniform(keys[6], (NA,), dtype=f32) > 0.5).astype(f32),
    )

    configs = [
        # BCE branch + atom head (one fused pallas_call, 2 BCE segments)
        SimpleNamespace(rmsd_prediction=False, rmsd_classification_cutoff=2.0,
                        atom_lig_confidence=True,
                        filtering_weight=1.0, filtering_weight_atom=0.5),
        # MSE branch + atom head (one fused pallas_call, MSE + BCE segments)
        SimpleNamespace(rmsd_prediction=True, rmsd_classification_cutoff=2.0,
                        atom_lig_confidence=True,
                        filtering_weight=1.0, filtering_weight_atom=0.25),
        # Cross-entropy branch alone
        SimpleNamespace(rmsd_prediction=False, rmsd_classification_cutoff=[1.0, 2.0, 4.0],
                        atom_lig_confidence=False,
                        filtering_weight=2.0, filtering_weight_atom=0.5),
        # Cross-entropy branch + atom head (now a single fused pallas_call)
        SimpleNamespace(rmsd_prediction=False, rmsd_classification_cutoff=[1.0, 2.0, 4.0],
                        atom_lig_confidence=True,
                        filtering_weight=2.0, filtering_weight_atom=0.5),
    ]

    for args in configs:
        ce_branch = (not args.rmsd_prediction
                     and isinstance(args.rmsd_classification_cutoff, list))
        outputs = {
            "filtering_pred": pred_logits if ce_branch else pred_scalar,
            "filtering_atom_pred": atom_pred,
        }
        module = FilteringLoss(args)
        loss, loss_dict = module(outputs, batch, apply_mean=True)
        jax.block_until_ready(loss)
        for v in loss_dict.values():
            jax.block_until_ready(v)

        if args.rmsd_prediction:
            ref_main = _ref_mse(pred_scalar, batch.rmsd)
        elif ce_branch:
            ref_main = _ref_ce(pred_logits, batch.y_binned)
        else:
            ref_main = _ref_bce(pred_scalar, batch.y)
        assert jnp.allclose(loss_dict["filtering_loss"], ref_main,
                            atol=1e-5, rtol=1e-5)

        ref_total = args.filtering_weight * ref_main
        if args.atom_lig_confidence:
            ref_atom = _ref_bce(atom_pred, batch.y_aa)
            assert jnp.allclose(loss_dict["atom_filtering_loss"], ref_atom,
                                atol=1e-5, rtol=1e-5)
            ref_total = ref_total + args.filtering_weight_atom * ref_atom
        assert jnp.allclose(loss, ref_total, atol=1e-5, rtol=1e-5)

    # --- Multi-block grid / dual-core / gating stress tests -----------------
    big_x = jax.random.normal(keys[7], (5000,), dtype=f32)
    big_y = (jax.random.uniform(keys[8], (5000,), dtype=f32) > 0.5).astype(f32)

    # Mixed-length MSE + BCE segments, forced tiny blocks, 2-core split:
    got = _fused_mean_losses(
        [("bce", big_x, big_y), ("mse", pred_scalar, batch.rmsd)],
        max_block_rows=8, num_cores=2)
    assert jnp.allclose(got[0], _ref_bce(big_x, big_y), atol=1e-5, rtol=1e-4)
    assert jnp.allclose(got[1], _ref_mse(pred_scalar, batch.rmsd),
                        atol=1e-5, rtol=1e-4)

    # CE (multi-column-block, tail mask) fused with a long atom BCE, 2-core split:
    big_logits = jax.random.normal(keys[9], (NA, C), dtype=f32)
    big_labels = jax.random.randint(keys[10], (NA,), 0, C, dtype=jnp.int32)
    got2 = _fused_mean_losses(
        [("ce", big_logits, big_labels), ("bce", big_x, big_y)],
        max_block_rows=8, max_block_cols=128, num_cores=2)
    assert jnp.allclose(got2[0], _ref_ce(big_logits, big_labels),
                        atol=1e-5, rtol=1e-4)
    assert jnp.allclose(got2[1], _ref_bce(big_x, big_y), atol=1e-5, rtol=1e-4)
    jax.block_until_ready(got2[0])

    print("KERNEL_OK")
</pallas_src>

<mosaic_0001>
module attributes {stable_mosaic.version = 11 : i64} {
  func.func @kernel(%arg0: i32, %arg1: i32, %arg2: memref<8x128xf32, #tpu.memory_space<vmem>>, %arg3: memref<8x128xf32, #tpu.memory_space<vmem>>, %arg4: memref<8x128xf32, #tpu.memory_space<vmem>>, %arg5: memref<8x128xf32, #tpu.memory_space<vmem>>, %arg6: memref<8x128xf32, #tpu.memory_space<vmem>>, %arg7: memref<8x128xf32, #tpu.memory_space<vmem>>) attributes {dimension_semantics = [#tpu.dimension_semantics<parallel>, #tpu.dimension_semantics<arbitrary>], iteration_bounds = array<i64: 1, 1>, scalar_prefetch = 0 : i64, scratch_operands = 0 : i64, tpu.core_type = #tpu.core_type<tc>, window_params = [{transform_indices = @transform_0, window_bounds = array<i64: 8, 128>}, {transform_indices = @transform_1, window_bounds = array<i64: 8, 128>}, {transform_indices = @transform_2, window_bounds = array<i64: 8, 128>}, {transform_indices = @transform_3, window_bounds = array<i64: 8, 128>}, {transform_indices = @transform_4, window_bounds = array<i64: 8, 128>}, {transform_indices = @transform_5, window_bounds = array<i64: 8, 128>}]} {
    %c0_i32 = arith.constant 0 : i32
    %0 = arith.cmpi eq, %arg1, %c0_i32 : i32
    %1 = arith.extui %0 : i1 to i32
    %c0_i32_0 = arith.constant 0 : i32
    %2 = arith.cmpi ne, %1, %c0_i32_0 : i32
    scf.if %2 {
      %cst_23 = arith.constant 0.000000e+00 : f32
      %40 = vector.broadcast %cst_23 : f32 to vector<8x128xf32>
      %c0_24 = arith.constant 0 : index
      %c0_25 = arith.constant 0 : index
      %41 = vector.load %arg6[%c0_24, %c0_25] : memref<8x128xf32, #tpu.memory_space<vmem>>, vector<8x128xf32>
      tpu.vector_store %arg6[%c0_24, %c0_25], %40 {strides = array<i32>} : memref<8x128xf32, #tpu.memory_space<vmem>>, vector<8x128xf32>,
      %cst_26 = arith.constant 0.000000e+00 : f32
      %42 = vector.broadcast %cst_26 : f32 to vector<8x128xf32>
      %c0_27 = arith.constant 0 : index
      %c0_28 = arith.constant 0 : index
      %43 = vector.load %arg7[%c0_27, %c0_28] : memref<8x128xf32, #tpu.memory_space<vmem>>, vector<8x128xf32>
      tpu.vector_store %arg7[%c0_27, %c0_28], %42 {strides = array<i32>} : memref<8x128xf32, #tpu.memory_space<vmem>>, vector<8x128xf32>,
    } else {
    }
    %c0 = arith.constant 0 : index
    %c0_1 = arith.constant 0 : index
    %3 = vector.load %arg2[%c0, %c0_1] : memref<8x128xf32, #tpu.memory_space<vmem>>, vector<8x128xf32>
    %c0_2 = arith.constant 0 : index
    %c0_3 = arith.constant 0 : index
    %4 = vector.load %arg3[%c0_2, %c0_3] : memref<8x128xf32, #tpu.memory_space<vmem>>, vector<8x128xf32>
    %cst = arith.constant 0.000000e+00 : f32
    %5 = vector.broadcast %cst : f32 to vector<8x128xf32>
    %6 = arith.maximumf %3, %5 : vector<8x128xf32>
    %7 = arith.mulf %3, %4 : vector<8x128xf32>
    %8 = arith.subf %6, %7 : vector<8x128xf32>
    %9 = math.absf %3 : vector<8x128xf32>
    %cst_4 = arith.constant 0.000000e+00 : f32
    %10 = vector.broadcast %cst_4 : f32 to vector<8x128xf32>
    %11 = arith.subf %10, %9 : vector<8x128xf32>
    %12 = math.exp %11 : vector<8x128xf32>
    %13 = math.log1p %12 : vector<8x128xf32>
    %14 = arith.addf %8, %13 : vector<8x128xf32>
    %c0_5 = arith.constant 0 : index
    %c0_6 = arith.constant 0 : index
    %15 = vector.load %arg6[%c0_5, %c0_6] : memref<8x128xf32, #tpu.memory_space<vmem>>, vector<1x128xf32>
    %cst_7 = arith.constant dense<0.000000e+00> : vector<128xf32>
    %16 = vector.multi_reduction <add>, %14, %cst_7 [0] : vector<8x128xf32> to vector<128xf32>
    %17 = vector.shape_cast %16 : vector<128xf32> to vector<1x128xf32>
    %18 = arith.addf %15, %17 : vector<1x128xf32>
    %c0_8 = arith.constant 0 : index
    %c0_9 = arith.constant 0 : index
    %19 = vector.load %arg6[%c0_8, %c0_9] : memref<8x128xf32, #tpu.memory_space<vmem>>, vector<1x128xf32>
    tpu.vector_store %arg6[%c0_8, %c0_9], %18 {strides = array<i32>} : memref<8x128xf32, #tpu.memory_space<vmem>>, vector<1x128xf32>,
    %c0_10 = arith.constant 0 : index
    %c0_11 = arith.constant 0 : index
    %20 = vector.load %arg4[%c0_10, %c0_11] : memref<8x128xf32, #tpu.memory_space<vmem>>, vector<8x128xf32>
    %c0_12 = arith.constant 0 : index
    %c0_13 = arith.constant 0 : index
    %21 = vector.load %arg5[%c0_12, %c0_13] : memref<8x128xf32, #tpu.memory_space<vmem>>, vector<8x128xf32>
    %cst_14 = arith.constant 0.000000e+00 : f32
    %22 = vector.broadcast %cst_14 : f32 to vector<8x128xf32>
    %23 = arith.maximumf %20, %22 : vector<8x128xf32>
    %24 = arith.mulf %20, %21 : vector<8x128xf32>
    %25 = arith.subf %23, %24 : vector<8x128xf32>
    %26 = math.absf %20 : vector<8x128xf32>
    %cst_15 = arith.constant 0.000000e+00 : f32
    %27 = vector.broadcast %cst_15 : f32 to vector<8x128xf32>
    %28 = arith.subf %27, %26 : vector<8x128xf32>
    %29 = math.exp %28 : vector<8x128xf32>
    %30 = math.log1p %29 : vector<8x128xf32>
    %31 = arith.addf %25, %30 : vector<8x128xf32>
    %c0_16 = arith.constant 0 : index
    %c0_17 = arith.constant 0 : index
    %32 = vector.load %arg7[%c0_16, %c0_17] : memref<8x128xf32, #tpu.memory_space<vmem>>, vector<1x128xf32>
    %cst_18 = arith.constant dense<0.000000e+00> : vector<128xf32>
    %33 = vector.multi_reduction <add>, %31, %cst_18 [0] : vector<8x128xf32> to vector<128xf32>
    %34 = vector.shape_cast %33 : vector<128xf32> to vector<1x128xf32>
    %35 = arith.addf %32, %34 : vector<1x128xf32>
    %c0_19 = arith.constant 0 : index
    %c0_20 = arith.constant 0 : index
    %36 = vector.load %arg7[%c0_19, %c0_20] : memref<8x128xf32, #tpu.memory_space<vmem>>, vector<1x128xf32>
    tpu.vector_store %arg7[%c0_19, %c0_20], %35 {strides = array<i32>} : memref<8x128xf32, #tpu.memory_space<vmem>>, vector<1x128xf32>,
    %c0_i32_21 = arith.constant 0 : i32
    %37 = arith.cmpi eq, %arg1, %c0_i32_21 : i32
    %38 = arith.extui %37 : i1 to i32
    %c0_i32_22 = arith.constant 0 : i32
    %39 = arith.cmpi ne, %38, %c0_i32_22 : i32
    scf.if %39 {
      %c0_23 = arith.constant 0 : index
      %c0_24 = arith.constant 0 : index
      %40 = vector.load %arg6[%c0_23, %c0_24] : memref<8x128xf32, #tpu.memory_space<vmem>>, vector<8x128xf32>
      %cst_25 = arith.constant 1.000000e-01 : f32
      %41 = vector.broadcast %cst_25 : f32 to vector<8x128xf32>
      %42 = arith.mulf %40, %41 : vector<8x128xf32>
      %c0_26 = arith.constant 0 : index
      %c0_27 = arith.constant 0 : index
      %43 = vector.load %arg6[%c0_26, %c0_27] : memref<8x128xf32, #tpu.memory_space<vmem>>, vector<8x128xf32>
      tpu.vector_store %arg6[%c0_26, %c0_27], %42 {strides = array<i32>} : memref<8x128xf32, #tpu.memory_space<vmem>>, vector<8x128xf32>,
      %c0_28 = arith.constant 0 : index
      %c0_29 = arith.constant 0 : index
      %44 = vector.load %arg7[%c0_28, %c0_29] : memref<8x128xf32, #tpu.memory_space<vmem>>, vector<8x128xf32>
      %cst_30 = arith.constant 0.00333333341 : f32
      %45 = vector.broadcast %cst_30 : f32 to vector<8x128xf32>
      %46 = arith.mulf %44, %45 : vector<8x128xf32>
      %c0_31 = arith.constant 0 : index
      %c0_32 = arith.constant 0 : index
      %47 = vector.load %arg7[%c0_31, %c0_32] : memref<8x128xf32, #tpu.memory_space<vmem>>, vector<8x128xf32>
      tpu.vector_store %arg7[%c0_31, %c0_32], %46 {strides = array<i32>} : memref<8x128xf32, #tpu.memory_space<vmem>>, vector<8x128xf32>,
    } else {
    }
    return
  }
  func.func @transform_0(%arg0: i32, %arg1: i32) -> (i32, i32) {
    %c1_i32 = arith.constant 1 : i32
    %0 = arith.muli %arg0, %c1_i32 : i32
    %1 = arith.addi %0, %arg1 : i32
    %c0_i32 = arith.constant 0 : i32
    %2 = arith.minsi %1, %c0_i32 : i32
    %c0_i32_0 = arith.constant 0 : i32
    %c0_i32_1 = arith.constant 0 : i32
    return %2, %c0_i32_0 : i32, i32
  }
  func.func @transform_1(%arg0: i32, %arg1: i32) -> (i32, i32) {
    %c1_i32 = arith.constant 1 : i32
    %0 = arith.muli %arg0, %c1_i32 : i32
    %1 = arith.addi %0, %arg1 : i32
    %c0_i32 = arith.constant 0 : i32
    %2 = arith.minsi %1, %c0_i32 : i32
    %c0_i32_0 = arith.constant 0 : i32
    %c0_i32_1 = arith.constant 0 : i32
    return %2, %c0_i32_0 : i32, i32
  }
  func.func @transform_2(%arg0: i32, %arg1: i32) -> (i32, i32) {
    %c1_i32 = arith.constant 1 : i32
    %0 = arith.muli %arg0, %c1_i32 : i32
    %1 = arith.addi %0, %arg1 : i32
    %c0_i32 = arith.constant 0 : i32
    %2 = arith.minsi %1, %c0_i32 : i32
    %c0_i32_0 = arith.constant 0 : i32
    %c0_i32_1 = arith.constant 0 : i32
    return %2, %c0_i32_0 : i32, i32
  }
  func.func @transform_3(%arg0: i32, %arg1: i32) -> (i32, i32) {
    %c1_i32 = arith.constant 1 : i32
    %0 = arith.muli %arg0, %c1_i32 : i32
    %1 = arith.addi %0, %arg1 : i32
    %c0_i32 = arith.constant 0 : i32
    %2 = arith.minsi %1, %c0_i32 : i32
    %c0_i32_0 = arith.constant 0 : i32
    %c0_i32_1 = arith.constant 0 : i32
    return %2, %c0_i32_0 : i32, i32
  }
  func.func @transform_4(%arg0: i32, %arg1: i32) -> (i32, i32) {
    %c0_i32 = arith.constant 0 : i32
    %c0_i32_0 = arith.constant 0 : i32
    return %arg0, %c0_i32 : i32, i32
  }
  func.func @transform_5(%arg0: i32, %arg1: i32) -> (i32, i32) {
    %c0_i32 = arith.constant 0 : i32
    %c0_i32_0 = arith.constant 0 : i32
    return %arg0, %c0_i32 : i32, i32
  }
}

</mosaic_0001>

<llo_original>
// kernel: tpu_custom_call.1
$region0: #{tpu_custom_call.1}
  #allocation0 [shape = 'u32[]', space=smem, size = 0x4, offset = 0x4, fixed_abs, tag = 'smem constant byte address 0x4 - core index']
  #allocation1 [shape = 'u32[144,128]{1,0:T(1,128)}', space=vmem, size = 0x12000, scoped, tag = 'internal scratch']
  %s0 = inlined_call_operand.hbm [shape: f32[8,128], index: 0, kind: input, shape index: {}]
  %s1 = inlined_call_operand.hbm [shape: f32[8,128], index: 1, kind: input, shape index: {}]
  %s2 = inlined_call_operand.hbm [shape: f32[8,128], index: 2, kind: input, shape index: {}]
  %s3 = inlined_call_operand.vmem [shape: f32[8,128], index: 3, kind: input, shape index: {}]
  %s4 = inlined_call_operand.hbm [shape: f32[8,128], index: 4, kind: output, shape index: {0}]
  %s5 = inlined_call_operand.hbm [shape: f32[8,128], index: 5, kind: output, shape index: {1}]
  %6 = xla_tuple %s4, %s5
  %s7 = sld [smem:[#allocation0]]
  $region54: #{tpu_custom_call.1} parent=0
    _
  %s9 = ssub.s32 1, %s7
  %s10 = scalar_select 0, %s9, %s7
  $region1: #{tpu_custom_call.1} parent=0
    #allocation2 [shape = 'u8[4096]{0}', space=vmem, size = 0x1000, scoped, tag = 'input window, operand 0, single buffered']
    #allocation3 [shape = 's32[1]{0}', space=sflag, size = 0x4, scoped, tag = 'scoped memory for tpu_custom_call.1']
    #allocation4 [shape = 's32[1]{0}', space=sflag, size = 0x4, scoped, tag = 'scoped memory for tpu_custom_call.1']
    #allocation5 [shape = 'u8[4096]{0}', space=vmem, size = 0x1000, scoped, tag = 'input window, operand 1, single buffered']
    #allocation6 [shape = 's32[1]{0}', space=sflag, size = 0x4, scoped, tag = 'scoped memory for tpu_custom_call.1']
    #allocation7 [shape = 'u8[4096]{0}', space=vmem, size = 0x1000, scoped, tag = 'input window, operand 2, single buffered']
    #allocation8 [shape = 'u8[4096]{0}', space=vmem, size = 0x1000, scoped, tag = 'output window, operand 0, single buffered']
    #allocation9 [shape = 'u8[4096]{0}', space=vmem, size = 0x1000, scoped, tag = 'output window, operand 1, single buffered']
    #allocation10 [shape = 's32[1]{0}', space=sflag, size = 0x4, scoped, tag = 'scoped memory for tpu_custom_call.1']
    %11 = vsyncpa [#allocation3], 0
    %12 = vsyncpa [#allocation6], 0
    %13 = vsyncpa [#allocation4], 0
    %14 = vsyncpa [#allocation10], 0
    // Predicated region
    $region2: #{tpu_custom_call.1} parent=1 // pred_check
      _
    $region3: #{tpu_custom_call.1} parent=1 // pred_check_branch
      %16 = sbr.rel (0) target = $region5
    $region4: #{tpu_custom_call.1} parent=1 // pred_region
      %s17 = sadd.s32 0, 0
      %p18 = scmp.lt.s32.totalorder %s17, 0
      %s19 = scalar_select %p18, %s17, 0
      %s21 = ssub.s32 128, 128
      %22 = vsyncadd [#allocation3], %s21
      %s23 = smul.addr %s19, 128
      %s24 = scalar_lea.hbm %s0, %s23
      %s26 = sshll.u32 [#allocation2], 4
      %s27 = int_to_ptr.vmem [resolvable:$true] %s26
      %29 = dma.hbm_to_vmem [thread:$0]  %s24, 128, %s27, [#allocation3]
    $region5: #{tpu_custom_call.1} parent=1 // pred_fallthru
      _
    // Predicated region
    $region6: #{tpu_custom_call.1} parent=1 // pred_check
      _
    $region7: #{tpu_custom_call.1} parent=1 // pred_check_branch
      %31 = sbr.rel (0) target = $region9
    $region8: #{tpu_custom_call.1} parent=1 // pred_region
      %s32 = sadd.s32 0, 0
      %p33 = scmp.lt.s32.totalorder %s32, 0
      %s34 = scalar_select %p33, %s32, 0
      %s36 = ssub.s32 128, 128
      %37 = vsyncadd [#allocation6], %s36
      %s38 = smul.addr %s34, 128
      %s39 = scalar_lea.hbm %s1, %s38
      %s41 = sshll.u32 [#allocation5], 4
      %s42 = int_to_ptr.vmem [resolvable:$true] %s41
      %44 = dma.hbm_to_vmem [thread:$0]  %s39, 128, %s42, [#allocation6]
    $region9: #{tpu_custom_call.1} parent=1 // pred_fallthru
      _
    // Predicated region
    $region10: #{tpu_custom_call.1} parent=1 // pred_check
      _
    $region11: #{tpu_custom_call.1} parent=1 // pred_check_branch
      %46 = sbr.rel (0) target = $region13
    $region12: #{tpu_custom_call.1} parent=1 // pred_region
      %s47 = sadd.s32 0, 0
      %p48 = scmp.lt.s32.totalorder %s47, 0
      %s49 = scalar_select %p48, %s47, 0
      %s51 = ssub.s32 128, 128
      %52 = vsyncadd [#allocation6], %s51
      %s53 = smul.addr %s49, 128
      %s54 = scalar_lea.hbm %s2, %s53
      %s56 = sshll.u32 [#allocation7], 4
      %s57 = int_to_ptr.vmem [resolvable:$true] %s56
      %59 = dma.hbm_to_vmem [thread:$0]  %s54, 128, %s57, [#allocation6]
    $region13: #{tpu_custom_call.1} parent=1 // pred_fallthru
      _
    // Predicated region
    $region14: #{tpu_custom_call.1} parent=1 // pred_check
      _
    $region15: #{tpu_custom_call.1} parent=1 // pred_check_branch
      %61 = sbr.rel (0) target = $region17
    $region16: #{tpu_custom_call.1} parent=1 // pred_region
      %s62 = sadd.s32 0, 0
      %p63 = scmp.lt.s32.totalorder %s62, 0
      %s64 = scalar_select %p63, %s62, 0
      %p65 = scmp.lt.s32.totalorder %s64, 0
      %s66 = scalar_select %p65, %s64, 0
      %s67 = smul.addr %s66, 8
      %s68 = scalar_lea.vmem %s3, %s67
      %s69 = sadd.s32 0, 0
      %p70 = scmp.lt.s32.totalorder %s69, 0
      %s71 = scalar_select %p70, %s69, 0
    $region17: #{tpu_custom_call.1} parent=1 // pred_fallthru
      _
    // Predicated region
    $region18: #{tpu_custom_call.1} parent=1 // pred_check
      _
    $region19: #{tpu_custom_call.1} parent=1 // pred_check_branch
      %73 = sbr.rel (0) target = $region21
    $region20: #{tpu_custom_call.1} parent=1 // pred_region
      %74 = dma.done [#allocation3], 128
    $region21: #{tpu_custom_call.1} parent=1 // pred_fallthru
      _
    // Predicated region
    $region22: #{tpu_custom_call.1} parent=1 // pred_check
      _
    $region23: #{tpu_custom_call.1} parent=1 // pred_check_branch
      %76 = sbr.rel (0) target = $region25
    $region24: #{tpu_custom_call.1} parent=1 // pred_region
      %77 = dma.done [#allocation6], 128
    $region25: #{tpu_custom_call.1} parent=1 // pred_fallthru
      _
    // Predicated region
    $region26: #{tpu_custom_call.1} parent=1 // pred_check
      _
    $region27: #{tpu_custom_call.1} parent=1 // pred_check_branch
      %79 = sbr.rel (0) target = $region29
    $region28: #{tpu_custom_call.1} parent=1 // pred_region
      %80 = dma.done [#allocation6], 128
    $region29: #{tpu_custom_call.1} parent=1 // pred_fallthru
      _
    %s81 = sadd.s32 0, 0
    %p82 = scmp.lt.s32.totalorder %s81, 0
    %s83 = scalar_select %p82, %s81, 0
    %p84 = scmp.lt.s32.totalorder %s83, 0
    %s85 = scalar_select %p84, %s83, 0
    %s86 = smul.addr %s85, 8
    %s87 = scalar_lea.vmem %s3, %s86
    %s88 = sadd.s32 0, 0
    %p89 = scmp.lt.s32.totalorder %s88, 0
    %s90 = scalar_select %p89, %s88, 0
    %s91 = sadd.s32 0, 0
    %p92 = scmp.lt.s32.totalorder %s91, 0
    %s93 = scalar_select %p92, %s91, 0
    %s94 = sadd.s32 0, 0
    %p95 = scmp.lt.s32.totalorder %s94, 0
    %s96 = scalar_select %p95, %s94, 0
    %s97 = sadd.s32 0, 0
    %p98 = scmp.lt.s32.totalorder %s97, 0
    %s99 = scalar_select %p98, %s97, 0
    %p100 = scmp.lt.s32.totalorder %s99, 0
    %s101 = scalar_select %p100, %s99, 0
    %s102 = smul.addr %s101, 8
    %s103 = scalar_lea.vmem %s3, %s102
    %s104 = sadd.s32 0, 0
    %p105 = scmp.lt.s32.totalorder %s104, 0
    %s106 = scalar_select %p105, %s104, 0
    %p107 = scmp.eq.s32.totalorder 0, 0
    // Predicated region
    $region30: #{tpu_custom_call.1} parent=1 // pred_check
      %p108 = pneg %p107
    $region31: #{tpu_custom_call.1} parent=1 // pred_check_branch
      %110 = sbr.rel (%p108) target = $region33
    $region32: #{tpu_custom_call.1} parent=1 // pred_region
      %111 = vst [vmem:[#allocation8] sm:$0xff] 0.0
      %112 = vst [vmem:[#allocation9] sm:$0xff] 0.0
    $region33: #{tpu_custom_call.1} parent=1 // pred_fallthru
      _
    %v113 = vld [vmem:[#allocation2] sm:$0xff]
    %v114 = vld [vmem:[#allocation5] sm:$0xff]
    %v115 = vmax.f32 %v113, 0.0
    %v116 = vmul.f32 %v113, %v114
    %v117 = vsub.f32 %v115, %v116
    %v118 = vand.u32 2147483647, %v113
    %v119 = vsub.f32 0.0, %v118
    %v120 = vmul.f32 %v119, 1.442695
    %v121 = vpow.pop %v120
    %v122 = vadd.f32 %v121, 1.0
    %v123 = vlog2.pop %v122
    %v124 = vmul.f32 %v123, 0.6931472
    %v125 = vmul.f32 -0.5, %v121
    %v126 = vadd.f32 %v125, 1.0
    %v127 = vmul.f32 %v126, %v121
    %v128 = vand.u32 2147483647, %v121
    %vm129 = vcmp.lt.f32.partialorder %v128, 0.0004427343
    %v130 = vsel %vm129, %v127, %v124
    %v131 = vadd.f32 %v117, %v130
    %v132 = vld [vmem:[#allocation8] sm:$0x1]
    %v133 = vrot.slane %v131, 4
    %v134 = vadd.f32 %v131, %v133
    %v135 = vrot.slane %v134, 2
    %v136 = vadd.f32 %v134, %v135
    %v137 = vrot.slane %v136, 1
    %v138 = vadd.f32 %v136, %v137
    %v139 = vadd.f32 %v132, %v138
    %140 = vst [vmem:[#allocation8] sm:$0x1] %v139
    %v141 = vld [vmem:[#allocation7] sm:$0xff]
    %v142 = vld [vmem:[%s103] sm:$0xff]
    %v143 = vmax.f32 %v141, 0.0
    %v144 = vmul.f32 %v141, %v142
    %v145 = vsub.f32 %v143, %v144
    %v146 = vand.u32 2147483647, %v141
    %v147 = vsub.f32 0.0, %v146
    %v148 = vmul.f32 %v147, 1.442695
    %v149 = vpow.pop %v148
    %v150 = vadd.f32 %v149, 1.0
    %v151 = vlog2.pop %v150
    %v152 = vmul.f32 %v151, 0.6931472
    %v153 = vmul.f32 -0.5, %v149
    %v154 = vadd.f32 %v153, 1.0
    %v155 = vmul.f32 %v154, %v149
    %v156 = vand.u32 2147483647, %v149
    %vm157 = vcmp.lt.f32.partialorder %v156, 0.0004427343
    %v158 = vsel %vm157, %v155, %v152
    %v159 = vadd.f32 %v145, %v158
    %v160 = vld [vmem:[#allocation9] sm:$0x1]
    %v161 = vrot.slane %v159, 4
    %v162 = vadd.f32 %v159, %v161
    %v163 = vrot.slane %v162, 2
    %v164 = vadd.f32 %v162, %v163
    %v165 = vrot.slane %v164, 1
    %v166 = vadd.f32 %v164, %v165
    %v167 = vadd.f32 %v160, %v166
    %168 = vst [vmem:[#allocation9] sm:$0x1] %v167
    // Predicated region
    $region34: #{tpu_custom_call.1} parent=1 // pred_check
      %p169 = pneg %p107
    $region35: #{tpu_custom_call.1} parent=1 // pred_check_branch
      %171 = sbr.rel (%p169) target = $region37
    $region36: #{tpu_custom_call.1} parent=1 // pred_region
      %v172 = vld [vmem:[#allocation8] sm:$0xff]
      %v173 = vmul.f32 %v172, 0.1
      %174 = vst [vmem:[#allocation8] sm:$0xff] %v173
      %v175 = vld [vmem:[#allocation9] sm:$0xff]
      %v176 = vmul.f32 %v175, 0.0033333334
      %177 = vst [vmem:[#allocation9] sm:$0xff] %v176
    $region37: #{tpu_custom_call.1} parent=1 // pred_fallthru
      _
    // Predicated region
    $region38: #{tpu_custom_call.1} parent=1 // pred_check
      _
    $region39: #{tpu_custom_call.1} parent=1 // pred_check_branch
      %179 = sbr.rel (0) target = $region41
    $region40: #{tpu_custom_call.1} parent=1 // pred_region
      %s181 = ssub.s32 128, 128
      %182 = vsyncadd [#allocation4], %s181
      %s184 = sshll.u32 [#allocation8], 4
      %s185 = int_to_ptr.vmem [resolvable:$true] %s184
      %187 = dma.vmem_to_hbm [thread:$0]  %s185, 128, %s4, [#allocation4]
    $region41: #{tpu_custom_call.1} parent=1 // pred_fallthru
      _
    // Predicated region
    $region42: #{tpu_custom_call.1} parent=1 // pred_check
      _
    $region43: #{tpu_custom_call.1} parent=1 // pred_check_branch
      %189 = sbr.rel (0) target = $region45
    $region44: #{tpu_custom_call.1} parent=1 // pred_region
      %s191 = ssub.s32 128, 128
      %192 = vsyncadd [#allocation10], %s191
      %s194 = sshll.u32 [#allocation9], 4
      %s195 = int_to_ptr.vmem [resolvable:$true] %s194
      %197 = dma.vmem_to_hbm [thread:$0]  %s195, 128, %s5, [#allocation10]
    $region45: #{tpu_custom_call.1} parent=1 // pred_fallthru
      _
    // Predicated region
    $region46: #{tpu_custom_call.1} parent=1 // pred_check
      _
    $region47: #{tpu_custom_call.1} parent=1 // pred_check_branch
      %199 = sbr.rel (0) target = $region49
    $region48: #{tpu_custom_call.1} parent=1 // pred_region
      %200 = dma.done [#allocation4], 128
    $region49: #{tpu_custom_call.1} parent=1 // pred_fallthru
      _
    // Predicated region
    $region50: #{tpu_custom_call.1} parent=1 // pred_check
      _
    $region51: #{tpu_custom_call.1} parent=1 // pred_check_branch
      %202 = sbr.rel (0) target = $region53
    $region52: #{tpu_custom_call.1} parent=1 // pred_region
      %203 = dma.done [#allocation10], 128
    $region53: #{tpu_custom_call.1} parent=1 // pred_fallthru
      _
    %204 = vsyncpa [#allocation3], 1
    %205 = vsyncpa [#allocation6], 1
    %206 = vsyncpa [#allocation4], 1
    %207 = vsyncpa [#allocation10], 1

</llo_original>
